<compile_context>
chip_gen: v7x
topology: tpu7x:2x2x1
jax: 0.10.0
libtpu: 0.0.40
codegen_flags: <defaults>
</compile_context>

<pallas_src>
from functools import partial

import jax
import jax.numpy as jnp
from jax import lax
from jax.experimental import pallas as pl
from jax.experimental.pallas import tpu as pltpu


SMOOTH_RELU_THRESH = 0.1   # self._d
EPS = 0.001                # self._eps


def _smooth_relu(v, d):
    relu = jnp.maximum(v, 0.0)
    sq = v * v / (2.0 * d)          # matches the given module (x.pow(2), not relu**2)
    lin = v - d / 2.0
    return jnp.where(relu < d, sq, lin)


def _softplus(u):
    # numerically stable softplus = log(1 + exp(u))
    return jnp.maximum(u, 0.0) + jnp.log1p(jnp.exp(-jnp.abs(u)))


def lyapunov_kernel(eps_ss_ref, x_ref, w01_ref, b01_ref, spu0_ref, g0_ref, out_ref):
    """One batch tile; batch lives on the 128-wide lane axis of the output.

    eps_ss_ref : SMEM (1, 1)       eps * sum(x**2)  (whole-tensor scalar)
    x_ref      : VMEM (TB, N)      contiguous row tile of x (no HBM transpose)
    w01_ref    : VMEM (H0+H1, N)   [W0; W1]        (resident across tiles)
    b01_ref    : VMEM (H0+H1, 1)   [b0; b1]        (resident)
    spu0_ref   : VMEM (H1, H0)     softplus(U0)    (precomputed, resident)
    g0_ref     : VMEM (H1, 1)      ICNN(0)         (precomputed, resident)
    out_ref    : VMEM (H1, TB)     lane-dense, already in PyTorch [H1, B] layout
    """
    d = SMOOTH_RELU_THRESH
    h0 = spu0_ref.shape[1]

    # Fused first-layer matmul: contract W01 [H0+H1, N] with x_tile [TB, N]
    # over the shared N axis -> [H0+H1, TB].  One MXU push covers W0 and W1.
    pre = lax.dot_general(
        w01_ref[...], x_ref[...],
        dimension_numbers=(((1,), (1,)), ((), ())),
        preferred_element_type=jnp.float32,
    ) + b01_ref[...]                                               # [H0+H1, TB]

    z1 = _smooth_relu(pre[:h0, :], d)                              # [H0, TB]
    g = _smooth_relu(
        pre[h0:, :] + jnp.dot(spu0_ref[...], z1,
                              preferred_element_type=jnp.float32),
        d)                                                         # [H1, TB]

    # lane-dense [H1, TB] store, already in the PyTorch output layout
    out_ref[...] = _smooth_relu(g - g0_ref[...], d) + eps_ss_ref[0, 0]


def _pick_tb(B, tb_max):
    """Batch-tile size: big tiles to amortize per-step overhead, >=2 programs
    when B is large enough to be worth sharding across TensorCores."""
    if B <= 1024:
        return B                                      # single small block
    half = ((-(-B // 2)) + 127) // 128 * 128          # round_up(ceil(B/2), 128)
    return min(tb_max, half)


@partial(jax.jit, static_argnames=("tb_max",))
def lyapunov_forward(x, params, *, tb_max=4096):
    """x: [B, N] float32.  Returns [H_last, B] (PyTorch convention)."""
    w0, b0, w1, b1, u0 = params
    B, N = x.shape
    H0 = w0.shape[0]
    H1 = w1.shape[0]
    d = SMOOTH_RELU_THRESH

    x = x.astype(jnp.float32)

    # ---- parameter-only precompute, hoisted out of the kernel hot path ----
    sp_u0 = _softplus(u0.astype(jnp.float32))                        # [H1, H0]
    z1_0 = _smooth_relu(b0.astype(jnp.float32), d)                   # [H0, 1]
    g0 = _smooth_relu(b1.astype(jnp.float32) + sp_u0 @ z1_0, d)      # [H1, 1]

    # ---- fused first layer: one [H0+H1, N] weight, one bias column ----
    w01 = jnp.concatenate([w0, w1], axis=0).astype(jnp.float32)      # [H0+H1, N]
    b01 = jnp.concatenate([b0, b1], axis=0).astype(jnp.float32)      # [H0+H1, 1]

    # ---- whole-tensor scalar term (spec: eps * x.pow(2).sum()) ----
    eps_ss = (EPS * jnp.sum(x * x)).reshape(1, 1)                    # (1, 1) -> SMEM

    # ---- batch tiling (x read directly as contiguous row tiles) ----
    tb = _pick_tb(B, tb_max)
    grid = (pl.cdiv(B, tb),)

    cost = pl.CostEstimate(
        flops=2 * B * (N * (H0 + H1) + H0 * H1),
        transcendentals=0,
        bytes_accessed=4 * (B * N + H1 * B + (H0 + H1) * (N + 1) + H1 * H0 + H1 + 1),
    )

    out = pl.pallas_call(
        lyapunov_kernel,
        out_shape=jax.ShapeDtypeStruct((H1, B), jnp.float32),
        grid=grid,
        in_specs=[
            pl.BlockSpec(memory_space=pltpu.MemorySpace.SMEM),       # eps_ss (1,1)
            pl.BlockSpec((tb, N), lambda i: (i, 0)),                 # x row tile
            pl.BlockSpec((H0 + H1, N), lambda i: (0, 0)),            # W01 (resident)
            pl.BlockSpec((H0 + H1, 1), lambda i: (0, 0)),            # b01 (resident)
            pl.BlockSpec((H1, H0), lambda i: (0, 0)),                # softplus(U0)
            pl.BlockSpec((H1, 1), lambda i: (0, 0)),                 # g0
        ],
        out_specs=pl.BlockSpec((H1, tb), lambda i: (0, i)),
        compiler_params=pltpu.CompilerParams(
            dimension_semantics=("parallel",),
            vmem_limit_bytes=32 * 1024 * 1024,
        ),
        cost_estimate=cost,
    )(eps_ss, x, w01, b01, sp_u0, g0)

    return out   # already [H_last, B]


def _reference(x, params):
    """Pure-JAX reference of the same forward (PyTorch semantics)."""
    w0, b0, w1, b1, u0 = params
    d, eps = SMOOTH_RELU_THRESH, EPS

    def icnn(xi):                     # xi: [B, N]
        z1 = _smooth_relu(xi @ w0.T + b0.reshape(1, -1), d)
        return _smooth_relu(xi @ w1.T + b1.reshape(1, -1)
                            + z1 @ _softplus(u0).T, d)

    g = icnn(x)
    g0 = icnn(jnp.zeros_like(x))
    return jnp.transpose(_smooth_relu(g - g0, d) + eps * jnp.sum(x ** 2))


def make_params(key, n, layer_sizes):
    """Deterministic xavier-normal-style init matching the torch shapes."""
    h0, h1 = layer_sizes
    k = jax.random.split(key, 5)

    def xavier(kk, shape):
        fan_in, fan_out = shape[1], shape[0]
        std = (2.0 / (fan_in + fan_out)) ** 0.5
        return std * jax.random.normal(kk, shape, dtype=jnp.float32)

    w0 = xavier(k[0], (h0, n))        # [H0, N]
    b0 = xavier(k[1], (h0, 1))        # [H0, 1]
    w1 = xavier(k[2], (h1, n))        # [H1, N]
    b1 = xavier(k[3], (h1, 1))        # [H1, 1]
    u0 = xavier(k[4], (h1, h0))       # [H1, H0]
    return (w0, b0, w1, b1, u0)


if __name__ == "__main__":
    key = jax.random.PRNGKey(0)
    kx, kx2, kp = jax.random.split(key, 3)

    N = 8                             # state dim
    layer_sizes = [64, 64]
    params = make_params(kp, N, layer_sizes)

    # --- small-batch case (single block) ---
    B = 4
    x = jax.random.normal(kx, (B, N), dtype=jnp.float32)
    out = jax.block_until_ready(lyapunov_forward(x, params))
    ref = _reference(x, params)
    assert out.shape == (layer_sizes[-1], B), out.shape
    assert jnp.allclose(out, ref, atol=1e-5, rtol=1e-5), "mismatch vs reference (B=4)"

    # --- ragged multi-tile case (exercises the tiled/padded path) ---
    B2 = 1300
    x2 = jax.random.normal(kx2, (B2, N), dtype=jnp.float32)
    out2 = jax.block_until_ready(lyapunov_forward(x2, params))
    ref2 = _reference(x2, params)
    assert out2.shape == (layer_sizes[-1], B2), out2.shape
    assert jnp.allclose(out2, ref2, atol=1e-4, rtol=1e-5), "mismatch vs reference (B=1300)"

    print("KERNEL_OK")
</pallas_src>

<mosaic_0001>
module attributes {stable_mosaic.version = 11 : i64} {
  func.func @lyapunov_kernel(%arg0: i32, %arg1: memref<1x1xf32, #tpu.memory_space<smem>>, %arg2: memref<4x8xf32, #tpu.memory_space<vmem>>, %arg3: memref<128x8xf32, #tpu.memory_space<vmem>>, %arg4: memref<128x1xf32, #tpu.memory_space<vmem>>, %arg5: memref<64x64xf32, #tpu.memory_space<vmem>>, %arg6: memref<64x1xf32, #tpu.memory_space<vmem>>, %arg7: memref<64x4xf32, #tpu.memory_space<vmem>>) attributes {dimension_semantics = [#tpu.dimension_semantics<parallel>], iteration_bounds = array<i64: 1>, scalar_prefetch = 0 : i64, scratch_operands = 0 : i64, tpu.core_type = #tpu.core_type<tc>, window_params = [{transform_indices = @transform_0, window_bounds = array<i64: 1, 1>}, {transform_indices = @transform_1, window_bounds = array<i64: 4, 8>}, {pipeline_mode = #tpu.pipeline_mode<synchronous>, transform_indices = @transform_2, window_bounds = array<i64: 128, 8>}, {pipeline_mode = #tpu.pipeline_mode<synchronous>, transform_indices = @transform_3, window_bounds = array<i64: 128, 1>}, {pipeline_mode = #tpu.pipeline_mode<synchronous>, transform_indices = @transform_4, window_bounds = array<i64: 64, 64>}, {pipeline_mode = #tpu.pipeline_mode<synchronous>, transform_indices = @transform_5, window_bounds = array<i64: 64, 1>}, {transform_indices = @transform_6, window_bounds = array<i64: 64, 4>}]} {
    %c0 = arith.constant 0 : index
    %c0_0 = arith.constant 0 : index
    %0 = vector.load %arg3[%c0, %c0_0] : memref<128x8xf32, #tpu.memory_space<vmem>>, vector<128x8xf32>
    %c0_1 = arith.constant 0 : index
    %c0_2 = arith.constant 0 : index
    %1 = vector.load %arg2[%c0_1, %c0_2] : memref<4x8xf32, #tpu.memory_space<vmem>>, vector<4x8xf32>
    %cst = arith.constant dense<0.000000e+00> : vector<128x4xf32>
    %2 = tpu.matmul %0, %1, %cst {dimension_numbers = #tpu.dot_dimension_numbers<[1], [1], [0], [0], [0, 0, 1, 0], [], []>} : vector<128x8xf32>, vector<4x8xf32>, vector<128x4xf32> -> vector<128x4xf32>
    %c0_3 = arith.constant 0 : index
    %c0_4 = arith.constant 0 : index
    %3 = vector.load %arg4[%c0_3, %c0_4] : memref<128x1xf32, #tpu.memory_space<vmem>>, vector<128x1xf32>
    %4 = vector.broadcast %3 : vector<128x1xf32> to vector<128x4xf32>
    %5 = arith.addf %2, %4 : vector<128x4xf32>
    %6 = vector.extract_strided_slice %5 {offsets = [0, 0], sizes = [64, 4], strides = [1, 1]} : vector<128x4xf32> to vector<64x4xf32>
    %cst_5 = arith.constant 0.000000e+00 : f32
    %7 = vector.broadcast %cst_5 : f32 to vector<64x4xf32>
    %8 = arith.maximumf %6, %7 : vector<64x4xf32>
    %9 = arith.mulf %6, %6 : vector<64x4xf32>
    %cst_6 = arith.constant 2.000000e-01 : f32
    %10 = vector.broadcast %cst_6 : f32 to vector<64x4xf32>
    %11 = arith.divf %9, %10 : vector<64x4xf32>
    %cst_7 = arith.constant 5.000000e-02 : f32
    %12 = vector.broadcast %cst_7 : f32 to vector<64x4xf32>
    %13 = arith.subf %6, %12 : vector<64x4xf32>
    %cst_8 = arith.constant 1.000000e-01 : f32
    %14 = vector.broadcast %cst_8 : f32 to vector<64x4xf32>
    %15 = arith.cmpf olt, %8, %14 : vector<64x4xf32>
    %16 = arith.select %15, %11, %13 : vector<64x4xi1>, vector<64x4xf32>
    %17 = vector.extract_strided_slice %5 {offsets = [64, 0], sizes = [64, 4], strides = [1, 1]} : vector<128x4xf32> to vector<64x4xf32>
    %c0_9 = arith.constant 0 : index
    %c0_10 = arith.constant 0 : index
    %18 = vector.load %arg5[%c0_9, %c0_10] : memref<64x64xf32, #tpu.memory_space<vmem>>, vector<64x64xf32>
    %cst_11 = arith.constant dense<0.000000e+00> : vector<64x4xf32>
    %19 = tpu.matmul %18, %16, %cst_11 {dimension_numbers = #tpu.dot_dimension_numbers<[1], [0], [0], [1], [0, 0, 1, 1], [], []>} : vector<64x64xf32>, vector<64x4xf32>, vector<64x4xf32> -> vector<64x4xf32>
    %20 = arith.addf %17, %19 : vector<64x4xf32>
    %cst_12 = arith.constant 0.000000e+00 : f32
    %21 = vector.broadcast %cst_12 : f32 to vector<64x4xf32>
    %22 = arith.maximumf %20, %21 : vector<64x4xf32>
    %23 = arith.mulf %20, %20 : vector<64x4xf32>
    %cst_13 = arith.constant 2.000000e-01 : f32
    %24 = vector.broadcast %cst_13 : f32 to vector<64x4xf32>
    %25 = arith.divf %23, %24 : vector<64x4xf32>
    %cst_14 = arith.constant 5.000000e-02 : f32
    %26 = vector.broadcast %cst_14 : f32 to vector<64x4xf32>
    %27 = arith.subf %20, %26 : vector<64x4xf32>
    %cst_15 = arith.constant 1.000000e-01 : f32
    %28 = vector.broadcast %cst_15 : f32 to vector<64x4xf32>
    %29 = arith.cmpf olt, %22, %28 : vector<64x4xf32>
    %30 = arith.select %29, %25, %27 : vector<64x4xi1>, vector<64x4xf32>
    %c0_16 = arith.constant 0 : index
    %c0_17 = arith.constant 0 : index
    %31 = vector.load %arg6[%c0_16, %c0_17] : memref<64x1xf32, #tpu.memory_space<vmem>>, vector<64x1xf32>
    %32 = vector.broadcast %31 : vector<64x1xf32> to vector<64x4xf32>
    %33 = arith.subf %30, %32 : vector<64x4xf32>
    %cst_18 = arith.constant 0.000000e+00 : f32
    %34 = vector.broadcast %cst_18 : f32 to vector<64x4xf32>
    %35 = arith.maximumf %33, %34 : vector<64x4xf32>
    %36 = arith.mulf %33, %33 : vector<64x4xf32>
    %cst_19 = arith.constant 2.000000e-01 : f32
    %37 = vector.broadcast %cst_19 : f32 to vector<64x4xf32>
    %38 = arith.divf %36, %37 : vector<64x4xf32>
    %cst_20 = arith.constant 5.000000e-02 : f32
    %39 = vector.broadcast %cst_20 : f32 to vector<64x4xf32>
    %40 = arith.subf %33, %39 : vector<64x4xf32>
    %cst_21 = arith.constant 1.000000e-01 : f32
    %41 = vector.broadcast %cst_21 : f32 to vector<64x4xf32>
    %42 = arith.cmpf olt, %35, %41 : vector<64x4xf32>
    %43 = arith.select %42, %38, %40 : vector<64x4xi1>, vector<64x4xf32>
    %c0_22 = arith.constant 0 : index
    %c0_23 = arith.constant 0 : index
    %44 = memref.load %arg1[%c0_22, %c0_23] : memref<1x1xf32, #tpu.memory_space<smem>>
    %45 = vector.broadcast %44 : f32 to vector<64x4xf32>
    %46 = arith.addf %43, %45 : vector<64x4xf32>
    %c0_24 = arith.constant 0 : index
    %c0_25 = arith.constant 0 : index
    %47 = vector.load %arg7[%c0_24, %c0_25] : memref<64x4xf32, #tpu.memory_space<vmem>>, vector<64x4xf32>
    tpu.vector_store %arg7[%c0_24, %c0_25], %46 {strides = array<i32>} : memref<64x4xf32, #tpu.memory_space<vmem>>, vector<64x4xf32>,
    return
  }
  func.func @transform_0(%arg0: i32) -> (i32, i32) {
    %c0_i32 = arith.constant 0 : i32
    %c0_i32_0 = arith.constant 0 : i32
    %c0_i32_1 = arith.constant 0 : i32
    return %c0_i32, %c0_i32_0 : i32, i32
  }
  func.func @transform_1(%arg0: i32) -> (i32, i32) {
    %c0_i32 = arith.constant 0 : i32
    %c0_i32_0 = arith.constant 0 : i32
    return %arg0, %c0_i32 : i32, i32
  }
  func.func @transform_2(%arg0: i32) -> (i32, i32) {
    %c0_i32 = arith.constant 0 : i32
    %c0_i32_0 = arith.constant 0 : i32
    %c0_i32_1 = arith.constant 0 : i32
    return %c0_i32, %c0_i32_0 : i32, i32
  }
  func.func @transform_3(%arg0: i32) -> (i32, i32) {
    %c0_i32 = arith.constant 0 : i32
    %c0_i32_0 = arith.constant 0 : i32
    %c0_i32_1 = arith.constant 0 : i32
    return %c0_i32, %c0_i32_0 : i32, i32
  }
  func.func @transform_4(%arg0: i32) -> (i32, i32) {
    %c0_i32 = arith.constant 0 : i32
    %c0_i32_0 = arith.constant 0 : i32
    %c0_i32_1 = arith.constant 0 : i32
    return %c0_i32, %c0_i32_0 : i32, i32
  }
  func.func @transform_5(%arg0: i32) -> (i32, i32) {
    %c0_i32 = arith.constant 0 : i32
    %c0_i32_0 = arith.constant 0 : i32
    %c0_i32_1 = arith.constant 0 : i32
    return %c0_i32, %c0_i32_0 : i32, i32
  }
  func.func @transform_6(%arg0: i32) -> (i32, i32) {
    %c0_i32 = arith.constant 0 : i32
    %c0_i32_0 = arith.constant 0 : i32
    return %c0_i32, %arg0 : i32, i32
  }
}

</mosaic_0001>

<llo_original>
// kernel: lyapunov_forward.1
$region0: #{lyapunov_forward.1}
  #allocation0 [shape = 'u32[]', space=smem, size = 0x4, offset = 0x4, fixed_abs, tag = 'smem constant byte address 0x4 - core index']
  #allocation1 [shape = 'u32[144,128]{1,0:T(1,128)}', space=vmem, size = 0x12000, scoped, tag = 'internal scratch']
  #allocation2 [shape = 'f32[1,1]{1,0:T(1,128)S(6)}', space=smem, size = 0x200, scoped, tag = 'scoped memory for lyapunov_forward.1']
  %s0 = inlined_call_operand.<no memory space> [shape: f32[1,1], index: 0, kind: input, shape index: {}]
  %s1 = inlined_call_operand.vmem [shape: f32[4,8], index: 1, kind: input, shape index: {}]
  %s2 = inlined_call_operand.vmem [shape: f32[128,8], index: 2, kind: input, shape index: {}]
  %s3 = inlined_call_operand.vmem [shape: f32[128,1], index: 3, kind: input, shape index: {}]
  %s4 = inlined_call_operand.vmem [shape: f32[64,64], index: 4, kind: input, shape index: {}]
  %s5 = inlined_call_operand.vmem [shape: f32[64,1], index: 5, kind: input, shape index: {}]
  %s6 = inlined_call_operand.vmem [shape: f32[64,4], index: 6, kind: output, shape index: {}]
  %s7 = sld [smem:[#allocation0]]
  $region34: #{lyapunov_forward.1} parent=0
    _
  %s9 = ssub.s32 1, %s7
  %s10 = scalar_select 0, %s9, %s7
  %11 = sst [smem:[#allocation2]] %s0
  // Predicated region
  $region2: #{lyapunov_forward.1} parent=0 // pred_check
    _
  $region3: #{lyapunov_forward.1} parent=0 // pred_check_branch
    %13 = sbr.rel (0) target = $region5
  $region4: #{lyapunov_forward.1} parent=0 // pred_region
    _
  $region5: #{lyapunov_forward.1} parent=0 // pred_fallthru
    _
  // Predicated region
  $region6: #{lyapunov_forward.1} parent=0 // pred_check
    _
  $region7: #{lyapunov_forward.1} parent=0 // pred_check_branch
    %15 = sbr.rel (0) target = $region9
  $region8: #{lyapunov_forward.1} parent=0 // pred_region
    _
  $region9: #{lyapunov_forward.1} parent=0 // pred_fallthru
    _
  // Predicated region
  $region10: #{lyapunov_forward.1} parent=0 // pred_check
    _
  $region11: #{lyapunov_forward.1} parent=0 // pred_check_branch
    %17 = sbr.rel (0) target = $region13
  $region12: #{lyapunov_forward.1} parent=0 // pred_region
    _
  $region13: #{lyapunov_forward.1} parent=0 // pred_fallthru
    _
  // Predicated region
  $region14: #{lyapunov_forward.1} parent=0 // pred_check
    _
  $region15: #{lyapunov_forward.1} parent=0 // pred_check_branch
    %19 = sbr.rel (0) target = $region17
  $region16: #{lyapunov_forward.1} parent=0 // pred_region
    _
  $region17: #{lyapunov_forward.1} parent=0 // pred_fallthru
    _
  // Predicated region
  $region18: #{lyapunov_forward.1} parent=0 // pred_check
    _
  $region19: #{lyapunov_forward.1} parent=0 // pred_check_branch
    %21 = sbr.rel (0) target = $region21
  $region20: #{lyapunov_forward.1} parent=0 // pred_region
    _
  $region21: #{lyapunov_forward.1} parent=0 // pred_fallthru
    _
  // Predicated region
  $region22: #{lyapunov_forward.1} parent=0 // pred_check
    _
  $region23: #{lyapunov_forward.1} parent=0 // pred_check_branch
    %23 = sbr.rel (0) target = $region25
  $region24: #{lyapunov_forward.1} parent=0 // pred_region
    _
  $region25: #{lyapunov_forward.1} parent=0 // pred_fallthru
    _
  %v24 = vld [vmem:[%s2] sm:$0xff]
  %v25 = vld [vmem:[%s2 + $0x8] sm:$0xff]
  %v26 = vld [vmem:[%s2 + $0x10] sm:$0xff]
  %v27 = vld [vmem:[%s2 + $0x18] sm:$0xff]
  %v28 = vld [vmem:[%s2 + $0x20] sm:$0xff]
  %v29 = vld [vmem:[%s2 + $0x28] sm:$0xff]
  %v30 = vld [vmem:[%s2 + $0x30] sm:$0xff]
  %v31 = vld [vmem:[%s2 + $0x38] sm:$0xff]
  %v32 = vld [vmem:[%s2 + $0x40] sm:$0xff]
  %v33 = vld [vmem:[%s2 + $0x48] sm:$0xff]
  %v34 = vld [vmem:[%s2 + $0x50] sm:$0xff]
  %v35 = vld [vmem:[%s2 + $0x58] sm:$0xff]
  %v36 = vld [vmem:[%s2 + $0x60] sm:$0xff]
  %v37 = vld [vmem:[%s2 + $0x68] sm:$0xff]
  %v38 = vld [vmem:[%s2 + $0x70] sm:$0xff]
  %v39 = vld [vmem:[%s2 + $0x78] sm:$0xff]
  %v40 = vld [vmem:[%s1] sm:$0xf]
  %v41 = vld [vmem:[%s3] sm:$0xff]
  %v42 = vld [vmem:[%s3 + $0x8] sm:$0xff]
  %v43 = vld [vmem:[%s3 + $0x10] sm:$0xff]
  %v44 = vld [vmem:[%s3 + $0x18] sm:$0xff]
  %v45 = vld [vmem:[%s3 + $0x20] sm:$0xff]
  %v46 = vld [vmem:[%s3 + $0x28] sm:$0xff]
  %v47 = vld [vmem:[%s3 + $0x30] sm:$0xff]
  %v48 = vld [vmem:[%s3 + $0x38] sm:$0xff]
  %v49 = vld [vmem:[%s3 + $0x40] sm:$0xff]
  %v50 = vld [vmem:[%s3 + $0x48] sm:$0xff]
  %v51 = vld [vmem:[%s3 + $0x50] sm:$0xff]
  %v52 = vld [vmem:[%s3 + $0x58] sm:$0xff]
  %v53 = vld [vmem:[%s3 + $0x60] sm:$0xff]
  %v54 = vld [vmem:[%s3 + $0x68] sm:$0xff]
  %v55 = vld [vmem:[%s3 + $0x70] sm:$0xff]
  %v56 = vld [vmem:[%s3 + $0x78] sm:$0xff]
  %58 = vset.pattern.permute.xlu0 0
  %59 = vperm.xlu0 %58, %v41
  %v60 = vpop.permute.xlu0 %59
  %63 = vset.pattern.permute.xlu0 0
  %64 = vperm.xlu0 %63, %v42
  %v65 = vpop.permute.xlu0 %64
  %68 = vset.pattern.permute.xlu0 0
  %69 = vperm.xlu0 %68, %v43
  %v70 = vpop.permute.xlu0 %69
  %73 = vset.pattern.permute.xlu0 0
  %74 = vperm.xlu0 %73, %v44
  %v75 = vpop.permute.xlu0 %74
  %78 = vset.pattern.permute.xlu0 0
  %79 = vperm.xlu0 %78, %v45
  %v80 = vpop.permute.xlu0 %79
  %83 = vset.pattern.permute.xlu0 0
  %84 = vperm.xlu0 %83, %v46
  %v85 = vpop.permute.xlu0 %84
  %88 = vset.pattern.permute.xlu0 0
  %89 = vperm.xlu0 %88, %v47
  %v90 = vpop.permute.xlu0 %89
  %93 = vset.pattern.permute.xlu0 0
  %94 = vperm.xlu0 %93, %v48
  %v95 = vpop.permute.xlu0 %94
  %98 = vset.pattern.permute.xlu0 0
  %99 = vperm.xlu0 %98, %v49
  %v100 = vpop.permute.xlu0 %99
  %103 = vset.pattern.permute.xlu0 0
  %104 = vperm.xlu0 %103, %v50
  %v105 = vpop.permute.xlu0 %104
  %108 = vset.pattern.permute.xlu0 0
  %109 = vperm.xlu0 %108, %v51
  %v110 = vpop.permute.xlu0 %109
  %113 = vset.pattern.permute.xlu0 0
  %114 = vperm.xlu0 %113, %v52
  %v115 = vpop.permute.xlu0 %114
  %118 = vset.pattern.permute.xlu0 0
  %119 = vperm.xlu0 %118, %v53
  %v120 = vpop.permute.xlu0 %119
  %123 = vset.pattern.permute.xlu0 0
  %124 = vperm.xlu0 %123, %v54
  %v125 = vpop.permute.xlu0 %124
  %128 = vset.pattern.permute.xlu0 0
  %129 = vperm.xlu0 %128, %v55
  %v130 = vpop.permute.xlu0 %129
  %133 = vset.pattern.permute.xlu0 0
  %134 = vperm.xlu0 %133, %v56
  %v135 = vpop.permute.xlu0 %134
  %vm137 = vcmask 64512
  %v139 = vsel %vm137, %v24, 0
  %v142 = vsel %vm137, %v25, 0
  %v145 = vsel %vm137, %v26, 0
  %v148 = vsel %vm137, %v27, 0
  %v151 = vsel %vm137, %v28, 0
  %v154 = vsel %vm137, %v29, 0
  %v157 = vsel %vm137, %v30, 0
  %v160 = vsel %vm137, %v31, 0
  %v163 = vsel %vm137, %v32, 0
  %v166 = vsel %vm137, %v33, 0
  %v169 = vsel %vm137, %v34, 0
  %v172 = vsel %vm137, %v35, 0
  %v175 = vsel %vm137, %v36, 0
  %v178 = vsel %vm137, %v37, 0
  %v181 = vsel %vm137, %v38, 0
  %v184 = vsel %vm137, %v39, 0
  %v187 = vsel %vm137, %v40, 0
  %189 = vmatprep.subr.mxu0 0.0
  %190 = vmatpush1.xpose.msra.mxu0 %v187
  %191 = vmatprep.subr.mxu0 0.0
  %192 = vmatpush1.xpose.msra.mxu0 0.0
  %193 = vmatprep.subr.mxu0 0.0
  %194 = vmatpush1.xpose.msra.mxu0 0.0
  %195 = vmatprep.subr.mxu0 0.0
  %196 = vmatpush1.xpose.msra.mxu0 0.0
  %197 = vmatprep.subr.mxu0 0.0
  %198 = vmatpush1.xpose.msra.mxu0 0.0
  %199 = vmatprep.subr.mxu0 0.0
  %200 = vmatpush1.xpose.msra.mxu0 0.0
  %201 = vmatprep.subr.mxu0 0.0
  %202 = vmatpush1.xpose.msra.mxu0 0.0
  %203 = vmatprep.subr.mxu0 0.0
  %204 = vmatpush1.xpose.msra.mxu0 0.0
  %205 = vmatprep.subr.mxu0 0.0
  %206 = vmatpush1.xpose.msra.mxu0 0.0
  %207 = vmatprep.subr.mxu0 0.0
  %208 = vmatpush1.xpose.msra.mxu0 0.0
  %209 = vmatprep.subr.mxu0 0.0
  %210 = vmatpush1.xpose.msra.mxu0 0.0
  %211 = vmatprep.subr.mxu0 0.0
  %212 = vmatpush1.xpose.msra.mxu0 0.0
  %213 = vmatprep.subr.mxu0 0.0
  %214 = vmatpush1.xpose.msra.mxu0 0.0
  %215 = vmatprep.subr.mxu0 0.0
  %216 = vmatpush1.xpose.msra.mxu0 0.0
  %217 = vmatprep.subr.mxu0 0.0
  %218 = vmatpush1.xpose.msra.mxu0 0.0
  %219 = vmatprep.subr.mxu0 0.0
  %220 = vmatpush1.xpose.msra.mxu0 0.0
  %221 = vmatprep.subr.mxu0 0.0
  %222 = vmatpush1.xpose.msra.mxu0 0.0
  %223 = vmatprep.subr.mxu0 0.0
  %224 = vmatpush1.xpose.msra.mxu0 0.0
  %225 = vmatprep.subr.mxu0 0.0
  %226 = vmatpush1.xpose.msra.mxu0 0.0
  %227 = vmatprep.subr.mxu0 0.0
  %228 = vmatpush1.xpose.msra.mxu0 0.0
  %229 = vmatprep.subr.mxu0 0.0
  %230 = vmatpush1.xpose.msra.mxu0 0.0
  %231 = vmatprep.subr.mxu0 0.0
  %232 = vmatpush1.xpose.msra.mxu0 0.0
  %233 = vmatprep.subr.mxu0 0.0
  %234 = vmatpush1.xpose.msra.mxu0 0.0
  %235 = vmatprep.subr.mxu0 0.0
  %236 = vmatpush1.xpose.msra.mxu0 0.0
  %237 = vmatprep.subr.mxu0 0.0
  %238 = vmatpush1.xpose.msra.mxu0 0.0
  %239 = vmatprep.subr.mxu0 0.0
  %240 = vmatpush1.xpose.msra.mxu0 0.0
  %241 = vmatprep.subr.mxu0 0.0
  %242 = vmatpush1.xpose.msra.mxu0 0.0
  %243 = vmatprep.subr.mxu0 0.0
  %244 = vmatpush1.xpose.msra.mxu0 0.0
  %245 = vmatprep.subr.mxu0 0.0
  %246 = vmatpush1.xpose.msra.mxu0 0.0
  %247 = vmatprep.subr.mxu0 0.0
  %248 = vmatpush1.xpose.msra.mxu0 0.0
  %249 = vmatprep.subr.mxu0 0.0
  %250 = vmatpush1.xpose.msra.mxu0 0.0
  %251 = vmatprep.subr.mxu0 0.0
  %252 = vmatpush1.xpose.msra.mxu0 0.0
  %253 = vmatprep.mubr.f32.mxu0 0.0
  %254 = vmatmul.mubr.f32.gmra.mrb[0].mxu0 %v139
  %v255 = vpop.f32.mrb[0].mxu0
  %v256 = vadd.f32 %v60, %v255
  %v257 = vpop.f32.mrb[0].mxu0
  %258 = vmatprep.mubr.f32.mxu0 0.0
  %259 = vmatmul.mubr.f32.gmra.mrb[0].mxu0 %v142
  %v260 = vpop.f32.mrb[0].mxu0
  %v261 = vadd.f32 %v65, %v260
  %v262 = vpop.f32.mrb[0].mxu0
  %263 = vmatprep.mubr.f32.mxu0 0.0
  %264 = vmatmul.mubr.f32.gmra.mrb[0].mxu0 %v145
  %v265 = vpop.f32.mrb[0].mxu0
  %v266 = vadd.f32 %v70, %v265
  %v267 = vpop.f32.mrb[0].mxu0
  %268 = vmatprep.mubr.f32.mxu0 0.0
  %269 = vmatmul.mubr.f32.gmra.mrb[0].mxu0 %v148
  %v270 = vpop.f32.mrb[0].mxu0
  %v271 = vadd.f32 %v75, %v270
  %v272 = vpop.f32.mrb[0].mxu0
  %273 = vmatprep.mubr.f32.mxu0 0.0
  %274 = vmatmul.mubr.f32.gmra.mrb[0].mxu0 %v151
  %v275 = vpop.f32.mrb[0].mxu0
  %v276 = vadd.f32 %v80, %v275
  %v277 = vpop.f32.mrb[0].mxu0
  %278 = vmatprep.mubr.f32.mxu0 0.0
  %279 = vmatmul.mubr.f32.gmra.mrb[0].mxu0 %v154
  %v280 = vpop.f32.mrb[0].mxu0
  %v281 = vadd.f32 %v85, %v280
  %v282 = vpop.f32.mrb[0].mxu0
  %283 = vmatprep.mubr.f32.mxu0 0.0
  %284 = vmatmul.mubr.f32.gmra.mrb[0].mxu0 %v157
  %v285 = vpop.f32.mrb[0].mxu0
  %v286 = vadd.f32 %v90, %v285
  %v287 = vpop.f32.mrb[0].mxu0
  %288 = vmatprep.mubr.f32.mxu0 0.0
  %289 = vmatmul.mubr.f32.gmra.mrb[0].mxu0 %v160
  %v290 = vpop.f32.mrb[0].mxu0
  %v291 = vadd.f32 %v95, %v290
  %v292 = vpop.f32.mrb[0].mxu0
  %293 = vmatprep.mubr.f32.mxu0 0.0
  %294 = vmatmul.mubr.f32.gmra.mrb[0].mxu0 %v163
  %v295 = vpop.f32.mrb[0].mxu0
  %v296 = vadd.f32 %v100, %v295
  %v297 = vpop.f32.mrb[0].mxu0
  %298 = vmatprep.mubr.f32.mxu0 0.0
  %299 = vmatmul.mubr.f32.gmra.mrb[0].mxu0 %v166
  %v300 = vpop.f32.mrb[0].mxu0
  %v301 = vadd.f32 %v105, %v300
  %v302 = vpop.f32.mrb[0].mxu0
  %303 = vmatprep.mubr.f32.mxu0 0.0
  %304 = vmatmul.mubr.f32.gmra.mrb[0].mxu0 %v169
  %v305 = vpop.f32.mrb[0].mxu0
  %v306 = vadd.f32 %v110, %v305
  %v307 = vpop.f32.mrb[0].mxu0
  %308 = vmatprep.mubr.f32.mxu0 0.0
  %309 = vmatmul.mubr.f32.gmra.mrb[0].mxu0 %v172
  %v310 = vpop.f32.mrb[0].mxu0
  %v311 = vadd.f32 %v115, %v310
  %v312 = vpop.f32.mrb[0].mxu0
  %313 = vmatprep.mubr.f32.mxu0 0.0
  %314 = vmatmul.mubr.f32.gmra.mrb[0].mxu0 %v175
  %v315 = vpop.f32.mrb[0].mxu0
  %v316 = vadd.f32 %v120, %v315
  %v317 = vpop.f32.mrb[0].mxu0
  %318 = vmatprep.mubr.f32.mxu0 0.0
  %319 = vmatmul.mubr.f32.gmra.mrb[0].mxu0 %v178
  %v320 = vpop.f32.mrb[0].mxu0
  %v321 = vadd.f32 %v125, %v320
  %v322 = vpop.f32.mrb[0].mxu0
  %323 = vmatprep.mubr.f32.mxu0 0.0
  %324 = vmatmul.mubr.f32.gmra.mrb[0].mxu0 %v181
  %v325 = vpop.f32.mrb[0].mxu0
  %v326 = vadd.f32 %v130, %v325
  %v327 = vpop.f32.mrb[0].mxu0
  %328 = vmatprep.mubr.f32.mxu0 0.0
  %329 = vmatmul.mubr.f32.gmra.mrb[0].mxu0 %v184
  %v330 = vpop.f32.mrb[0].mxu0
  %v331 = vadd.f32 %v135, %v330
  %v332 = vpop.f32.mrb[0].mxu0
  %333 = vdwg.mxu0
  %v334 = vmax.f32 %v256, 0.0
  %v335 = vmax.f32 %v261, 0.0
  %v336 = vmax.f32 %v266, 0.0
  %v337 = vmax.f32 %v271, 0.0
  %v338 = vmax.f32 %v276, 0.0
  %v339 = vmax.f32 %v281, 0.0
  %v340 = vmax.f32 %v286, 0.0
  %v341 = vmax.f32 %v291, 0.0
  %v342 = vmul.f32 %v256, %v256
  %v343 = vmul.f32 %v261, %v261
  %v344 = vmul.f32 %v266, %v266
  %v345 = vmul.f32 %v271, %v271
  %v346 = vmul.f32 %v276, %v276
  %v347 = vmul.f32 %v281, %v281
  %v348 = vmul.f32 %v286, %v286
  %v349 = vmul.f32 %v291, %v291
  %v350 = vrcp.pop 0.2
  %v351 = vmul.f32 %v342, %v350
  %v352 = vmul.f32 %v343, %v350
  %v353 = vmul.f32 %v344, %v350
  %v354 = vmul.f32 %v345, %v350
  %v355 = vmul.f32 %v346, %v350
  %v356 = vmul.f32 %v347, %v350
  %v357 = vmul.f32 %v348, %v350
  %v358 = vmul.f32 %v349, %v350
  %v359 = vsub.f32 %v256, 0.05
  %v360 = vsub.f32 %v261, 0.05
  %v361 = vsub.f32 %v266, 0.05
  %v362 = vsub.f32 %v271, 0.05
  %v363 = vsub.f32 %v276, 0.05
  %v364 = vsub.f32 %v281, 0.05
  %v365 = vsub.f32 %v286, 0.05
  %v366 = vsub.f32 %v291, 0.05
  %vm367 = vcmp.lt.f32.partialorder %v334, 0.1
  %vm368 = vcmp.lt.f32.partialorder %v335, 0.1
  %vm369 = vcmp.lt.f32.partialorder %v336, 0.1
  %vm370 = vcmp.lt.f32.partialorder %v337, 0.1
  %vm371 = vcmp.lt.f32.partialorder %v338, 0.1
  %vm372 = vcmp.lt.f32.partialorder %v339, 0.1
  %vm373 = vcmp.lt.f32.partialorder %v340, 0.1
  %vm374 = vcmp.lt.f32.partialorder %v341, 0.1
  %v375 = vsel %vm367, %v351, %v359
  %v376 = vsel %vm368, %v352, %v360
  %v377 = vsel %vm369, %v353, %v361
  %v378 = vsel %vm370, %v354, %v362
  %v379 = vsel %vm371, %v355, %v363
  %v380 = vsel %vm372, %v356, %v364
  %v381 = vsel %vm373, %v357, %v365
  %v382 = vsel %vm374, %v358, %v366
  %v383 = vld [vmem:[%s4] sm:$0xff]
  %v384 = vld [vmem:[%s4 + $0x8] sm:$0xff]
  %v385 = vld [vmem:[%s4 + $0x10] sm:$0xff]
  %v386 = vld [vmem:[%s4 + $0x18] sm:$0xff]
  %v387 = vld [vmem:[%s4 + $0x20] sm:$0xff]
  %v388 = vld [vmem:[%s4 + $0x28] sm:$0xff]
  %v389 = vld [vmem:[%s4 + $0x30] sm:$0xff]
  %v390 = vld [vmem:[%s4 + $0x38] sm:$0xff]
  %vm391 = vcmask 523264
  %v393 = vsel %vm391, %v383, 0
  %v396 = vsel %vm391, %v384, 0
  %v399 = vsel %vm391, %v385, 0
  %v402 = vsel %vm391, %v386, 0
  %v405 = vsel %vm391, %v387, 0
  %v408 = vsel %vm391, %v388, 0
  %v411 = vsel %vm391, %v389, 0
  %v414 = vsel %vm391, %v390, 0
  %416 = vmatprep.subr.mxu0 0.0
  %417 = vmatpush1.msra.mxu0 %v375
  %418 = vmatprep.subr.mxu0 0.0
  %419 = vmatpush1.msra.mxu0 %v376
  %420 = vmatprep.subr.mxu0 0.0
  %421 = vmatpush1.msra.mxu0 %v377
  %422 = vmatprep.subr.mxu0 0.0
  %423 = vmatpush1.msra.mxu0 %v378
  %424 = vmatprep.subr.mxu0 0.0
  %425 = vmatpush1.msra.mxu0 %v379
  %426 = vmatprep.subr.mxu0 0.0
  %427 = vmatpush1.msra.mxu0 %v380
  %428 = vmatprep.subr.mxu0 0.0
  %429 = vmatpush1.msra.mxu0 %v381
  %430 = vmatprep.subr.mxu0 0.0
  %431 = vmatpush1.msra.mxu0 %v382
  %432 = vmatprep.subr.mxu0 0.0
  %433 = vmatpush1.msra.mxu0 0.0
  %434 = vmatprep.subr.mxu0 0.0
  %435 = vmatpush1.msra.mxu0 0.0
  %436 = vmatprep.subr.mxu0 0.0
  %437 = vmatpush1.msra.mxu0 0.0
  %438 = vmatprep.subr.mxu0 0.0
  %439 = vmatpush1.msra.mxu0 0.0
  %440 = vmatprep.subr.mxu0 0.0
  %441 = vmatpush1.msra.mxu0 0.0
  %442 = vmatprep.subr.mxu0 0.0
  %443 = vmatpush1.msra.mxu0 0.0
  %444 = vmatprep.subr.mxu0 0.0
  %445 = vmatpush1.msra.mxu0 0.0
  %446 = vmatprep.subr.mxu0 0.0
  %447 = vmatpush1.msra.mxu0 0.0
  %448 = vmatprep.subr.mxu0 0.0
  %449 = vmatpush1.msra.mxu0 0.0
  %450 = vmatprep.subr.mxu0 0.0
  %451 = vmatpush1.msra.mxu0 0.0
  %452 = vmatprep.subr.mxu0 0.0
  %453 = vmatpush1.msra.mxu0 0.0
  %454 = vmatprep.subr.mxu0 0.0
  %455 = vmatpush1.msra.mxu0 0.0
  %456 = vmatprep.subr.mxu0 0.0
  %457 = vmatpush1.msra.mxu0 0.0
  %458 = vmatprep.subr.mxu0 0.0
  %459 = vmatpush1.msra.mxu0 0.0
  %460 = vmatprep.subr.mxu0 0.0
  %461 = vmatpush1.msra.mxu0 0.0
  %462 = vmatprep.subr.mxu0 0.0
  %463 = vmatpush1.msra.mxu0 0.0
  %464 = vmatprep.subr.mxu0 0.0
  %465 = vmatpush1.msra.mxu0 0.0
  %466 = vmatprep.subr.mxu0 0.0
  %467 = vmatpush1.msra.mxu0 0.0
  %468 = vmatprep.subr.mxu0 0.0
  %469 = vmatpush1.msra.mxu0 0.0
  %470 = vmatprep.subr.mxu0 0.0
  %471 = vmatpush1.msra.mxu0 0.0
  %472 = vmatprep.subr.mxu0 0.0
  %473 = vmatpush1.msra.mxu0 0.0
  %474 = vmatprep.subr.mxu0 0.0
  %475 = vmatpush1.msra.mxu0 0.0
  %476 = vmatprep.subr.mxu0 0.0
  %477 = vmatpush1.msra.mxu0 0.0
  %478 = vmatprep.subr.mxu0 0.0
  %479 = vmatpush1.msra.mxu0 0.0
  %480 = vmatprep.mubr.f32.mxu0 0.0
  %481 = vmatmul.mubr.f32.gmra.mrb[0].mxu0 %v393
  %v482 = vpop.f32.mrb[0].mxu0
  %v483 = vadd.f32 0.0, %v482
  %v484 = vpop.f32.mrb[0].mxu0
  %485 = vmatprep.mubr.f32.mxu0 0.0
  %486 = vmatmul.mubr.f32.gmra.mrb[0].mxu0 %v396
  %v487 = vpop.f32.mrb[0].mxu0
  %v488 = vadd.f32 0.0, %v487
  %v489 = vpop.f32.mrb[0].mxu0
  %490 = vmatprep.mubr.f32.mxu0 0.0
  %491 = vmatmul.mubr.f32.gmra.mrb[0].mxu0 %v399
  %v492 = vpop.f32.mrb[0].mxu0
  %v493 = vadd.f32 0.0, %v492
  %v494 = vpop.f32.mrb[0].mxu0
  %495 = vmatprep.mubr.f32.mxu0 0.0
  %496 = vmatmul.mubr.f32.gmra.mrb[0].mxu0 %v402
  %v497 = vpop.f32.mrb[0].mxu0
  %v498 = vadd.f32 0.0, %v497
  %v499 = vpop.f32.mrb[0].mxu0
  %500 = vmatprep.mubr.f32.mxu0 0.0
  %501 = vmatmul.mubr.f32.gmra.mrb[0].mxu0 %v405
  %v502 = vpop.f32.mrb[0].mxu0
  %v503 = vadd.f32 0.0, %v502
  %v504 = vpop.f32.mrb[0].mxu0
  %505 = vmatprep.mubr.f32.mxu0 0.0
  %506 = vmatmul.mubr.f32.gmra.mrb[0].mxu0 %v408
  %v507 = vpop.f32.mrb[0].mxu0
  %v508 = vadd.f32 0.0, %v507
  %v509 = vpop.f32.mrb[0].mxu0
  %510 = vmatprep.mubr.f32.mxu0 0.0
  %511 = vmatmul.mubr.f32.gmra.mrb[0].mxu0 %v411
  %v512 = vpop.f32.mrb[0].mxu0
  %v513 = vadd.f32 0.0, %v512
  %v514 = vpop.f32.mrb[0].mxu0
  %515 = vmatprep.mubr.f32.mxu0 0.0
  %516 = vmatmul.mubr.f32.gmra.mrb[0].mxu0 %v414
  %v517 = vpop.f32.mrb[0].mxu0
  %v518 = vadd.f32 0.0, %v517
  %v519 = vpop.f32.mrb[0].mxu0
  %520 = vdwg.mxu0
  %v521 = vadd.f32 %v296, %v483
  %v522 = vadd.f32 %v301, %v488
  %v523 = vadd.f32 %v306, %v493
  %v524 = vadd.f32 %v311, %v498
  %v525 = vadd.f32 %v316, %v503
  %v526 = vadd.f32 %v321, %v508
  %v527 = vadd.f32 %v326, %v513
  %v528 = vadd.f32 %v331, %v518
  %v529 = vmax.f32 %v521, 0.0
  %v530 = vmax.f32 %v522, 0.0
  %v531 = vmax.f32 %v523, 0.0
  %v532 = vmax.f32 %v524, 0.0
  %v533 = vmax.f32 %v525, 0.0
  %v534 = vmax.f32 %v526, 0.0
  %v535 = vmax.f32 %v527, 0.0
  %v536 = vmax.f32 %v528, 0.0
  %v537 = vmul.f32 %v521, %v521
  %v538 = vmul.f32 %v522, %v522
  %v539 = vmul.f32 %v523, %v523
  %v540 = vmul.f32 %v524, %v524
  %v541 = vmul.f32 %v525, %v525
  %v542 = vmul.f32 %v526, %v526
  %v543 = vmul.f32 %v527, %v527
  %v544 = vmul.f32 %v528, %v528
  %v545 = vmul.f32 %v537, %v350
  %v546 = vmul.f32 %v538, %v350
  %v547 = vmul.f32 %v539, %v350
  %v548 = vmul.f32 %v540, %v350
  %v549 = vmul.f32 %v541, %v350
  %v550 = vmul.f32 %v542, %v350
  %v551 = vmul.f32 %v543, %v350
  %v552 = vmul.f32 %v544, %v350
  %v553 = vsub.f32 %v521, 0.05
  %v554 = vsub.f32 %v522, 0.05
  %v555 = vsub.f32 %v523, 0.05
  %v556 = vsub.f32 %v524, 0.05
  %v557 = vsub.f32 %v525, 0.05
  %v558 = vsub.f32 %v526, 0.05
  %v559 = vsub.f32 %v527, 0.05
  %v560 = vsub.f32 %v528, 0.05
  %vm561 = vcmp.lt.f32.partialorder %v529, 0.1
  %vm562 = vcmp.lt.f32.partialorder %v530, 0.1
  %vm563 = vcmp.lt.f32.partialorder %v531, 0.1
  %vm564 = vcmp.lt.f32.partialorder %v532, 0.1
  %vm565 = vcmp.lt.f32.partialorder %v533, 0.1
  %vm566 = vcmp.lt.f32.partialorder %v534, 0.1
  %vm567 = vcmp.lt.f32.partialorder %v535, 0.1
  %vm568 = vcmp.lt.f32.partialorder %v536, 0.1
  %v569 = vsel %vm561, %v545, %v553
  %v570 = vsel %vm562, %v546, %v554
  %v571 = vsel %vm563, %v547, %v555
  %v572 = vsel %vm564, %v548, %v556
  %v573 = vsel %vm565, %v549, %v557
  %v574 = vsel %vm566, %v550, %v558
  %v575 = vsel %vm567, %v551, %v559
  %v576 = vsel %vm568, %v552, %v560
  %v577 = vld [vmem:[%s5] sm:$0xff]
  %v578 = vld [vmem:[%s5 + $0x8] sm:$0xff]
  %v579 = vld [vmem:[%s5 + $0x10] sm:$0xff]
  %v580 = vld [vmem:[%s5 + $0x18] sm:$0xff]
  %v581 = vld [vmem:[%s5 + $0x20] sm:$0xff]
  %v582 = vld [vmem:[%s5 + $0x28] sm:$0xff]
  %v583 = vld [vmem:[%s5 + $0x30] sm:$0xff]
  %v584 = vld [vmem:[%s5 + $0x38] sm:$0xff]
  %586 = vset.pattern.permute.xlu0 0
  %587 = vperm.xlu0 %586, %v577
  %v588 = vpop.permute.xlu0 %587
  %591 = vset.pattern.permute.xlu0 0
  %592 = vperm.xlu0 %591, %v578
  %v593 = vpop.permute.xlu0 %592
  %596 = vset.pattern.permute.xlu0 0
  %597 = vperm.xlu0 %596, %v579
  %v598 = vpop.permute.xlu0 %597
  %601 = vset.pattern.permute.xlu0 0
  %602 = vperm.xlu0 %601, %v580
  %v603 = vpop.permute.xlu0 %602
  %606 = vset.pattern.permute.xlu0 0
  %607 = vperm.xlu0 %606, %v581
  %v608 = vpop.permute.xlu0 %607
  %611 = vset.pattern.permute.xlu0 0
  %612 = vperm.xlu0 %611, %v582
  %v613 = vpop.permute.xlu0 %612
  %616 = vset.pattern.permute.xlu0 0
  %617 = vperm.xlu0 %616, %v583
  %v618 = vpop.permute.xlu0 %617
  %621 = vset.pattern.permute.xlu0 0
  %622 = vperm.xlu0 %621, %v584
  %v623 = vpop.permute.xlu0 %622
  %v625 = vsub.f32 %v569, %v588
  %v626 = vsub.f32 %v570, %v593
  %v627 = vsub.f32 %v571, %v598
  %v628 = vsub.f32 %v572, %v603
  %v629 = vsub.f32 %v573, %v608
  %v630 = vsub.f32 %v574, %v613
  %v631 = vsub.f32 %v575, %v618
  %v632 = vsub.f32 %v576, %v623
  %v633 = vmax.f32 %v625, 0.0
  %v634 = vmax.f32 %v626, 0.0
  %v635 = vmax.f32 %v627, 0.0
  %v636 = vmax.f32 %v628, 0.0
  %v637 = vmax.f32 %v629, 0.0
  %v638 = vmax.f32 %v630, 0.0
  %v639 = vmax.f32 %v631, 0.0
  %v640 = vmax.f32 %v632, 0.0
  %v641 = vmul.f32 %v625, %v625
  %v642 = vmul.f32 %v626, %v626
  %v643 = vmul.f32 %v627, %v627
  %v644 = vmul.f32 %v628, %v628
  %v645 = vmul.f32 %v629, %v629
  %v646 = vmul.f32 %v630, %v630
  %v647 = vmul.f32 %v631, %v631
  %v648 = vmul.f32 %v632, %v632
  %v649 = vmul.f32 %v641, %v350
  %v650 = vmul.f32 %v642, %v350
  %v651 = vmul.f32 %v643, %v350
  %v652 = vmul.f32 %v644, %v350
  %v653 = vmul.f32 %v645, %v350
  %v654 = vmul.f32 %v646, %v350
  %v655 = vmul.f32 %v647, %v350
  %v656 = vmul.f32 %v648, %v350
  %v657 = vsub.f32 %v625, 0.05
  %v658 = vsub.f32 %v626, 0.05
  %v659 = vsub.f32 %v627, 0.05
  %v660 = vsub.f32 %v628, 0.05
  %v661 = vsub.f32 %v629, 0.05
  %v662 = vsub.f32 %v630, 0.05
  %v663 = vsub.f32 %v631, 0.05
  %v664 = vsub.f32 %v632, 0.05
  %vm665 = vcmp.lt.f32.partialorder %v633, 0.1
  %vm666 = vcmp.lt.f32.partialorder %v634, 0.1
  %vm667 = vcmp.lt.f32.partialorder %v635, 0.1
  %vm668 = vcmp.lt.f32.partialorder %v636, 0.1
  %vm669 = vcmp.lt.f32.partialorder %v637, 0.1
  %vm670 = vcmp.lt.f32.partialorder %v638, 0.1
  %vm671 = vcmp.lt.f32.partialorder %v639, 0.1
  %vm672 = vcmp.lt.f32.partialorder %v640, 0.1
  %v673 = vsel %vm665, %v649, %v657
  %v674 = vsel %vm666, %v650, %v658
  %v675 = vsel %vm667, %v651, %v659
  %v676 = vsel %vm668, %v652, %v660
  %v677 = vsel %vm669, %v653, %v661
  %v678 = vsel %vm670, %v654, %v662
  %v679 = vsel %vm671, %v655, %v663
  %v680 = vsel %vm672, %v656, %v664
  %s681 = sld [smem:[#allocation2]]
  %v682 = vstv %s681
  %v683 = vadd.f32 %v673, %v682
  %v684 = vadd.f32 %v674, %v682
  %v685 = vadd.f32 %v675, %v682
  %v686 = vadd.f32 %v676, %v682
  %v687 = vadd.f32 %v677, %v682
  %v688 = vadd.f32 %v678, %v682
  %v689 = vadd.f32 %v679, %v682
  %v690 = vadd.f32 %v680, %v682
  %vm691 = vcmask 31744
  %692 = vst.msk [vmem:[%s6] sm:$0xff] %vm691, %v683
  %693 = vst.msk [vmem:[%s6 + $0x8] sm:$0xff] %vm691, %v684
  %694 = vst.msk [vmem:[%s6 + $0x10] sm:$0xff] %vm691, %v685
  %695 = vst.msk [vmem:[%s6 + $0x18] sm:$0xff] %vm691, %v686
  %696 = vst.msk [vmem:[%s6 + $0x20] sm:$0xff] %vm691, %v687
  %697 = vst.msk [vmem:[%s6 + $0x28] sm:$0xff] %vm691, %v688
  %698 = vst.msk [vmem:[%s6 + $0x30] sm:$0xff] %vm691, %v689
  %699 = vst.msk [vmem:[%s6 + $0x38] sm:$0xff] %vm691, %v690
  // Predicated region
  $region26: #{lyapunov_forward.1} parent=0 // pred_check
    _
  $region27: #{lyapunov_forward.1} parent=0 // pred_check_branch
    %701 = sbr.rel (0) target = $region29
  $region28: #{lyapunov_forward.1} parent=0 // pred_region
    _
  $region29: #{lyapunov_forward.1} parent=0 // pred_fallthru
    _
  // Predicated region
  $region30: #{lyapunov_forward.1} parent=0 // pred_check
    _
  $region31: #{lyapunov_forward.1} parent=0 // pred_check_branch
    %703 = sbr.rel (0) target = $region33
  $region32: #{lyapunov_forward.1} parent=0 // pred_region
    _
  $region33: #{lyapunov_forward.1} parent=0 // pred_fallthru
    _

</llo_original>
